<compile_context>
chip_gen: v7x
topology: tpu7x:2x2x1
jax: 0.10.0
libtpu: 0.0.40
codegen_flags: <defaults>
</compile_context>

<pallas_src>
import functools

import jax
import jax.numpy as jnp
import numpy as np
from jax.experimental import pallas as pl
from jax.experimental.pallas import tpu as pltpu


def ca_layer_kernel(p_ref, w1_ref, x_ref, wc1_ref, bc1_ref, wc2_ref, bc2_ref,
                    o_ref, *, nb, hw):
    # p_ref  : (1, 9*C, nb*HW)  bf16  im2col patches of nb images (lane dim dense)
    # w1_ref : (C, 9*C)         bf16  3x3 conv weight, (out_ch, tap*in_ch)
    # x_ref  : (1, C, nb*HW)    f32   residual inputs (NCHW viewed flat, aliased to out)
    # wc1_ref: (C, Cr)          f32   squeeze 1x1 conv (transposed PyTorch layout)
    # bc1_ref: (1, Cr)          f32
    # wc2_ref: (C, Cr)          f32   excite 1x1 conv (PyTorch layout)
    # bc2_ref: (C, 1)           f32
    # o_ref  : (1, C, nb*HW)    f32

    # conv3x3 (stride 1, pad 1, no bias) for all nb images as a single MXU matmul.
    t2 = jnp.dot(w1_ref[...], p_ref[0],
                 preferred_element_type=jnp.float32)              # (C, nb*HW) f32
    t2 = jnp.maximum(t2, 0.0)                                     # ReLU

    inv_hw = 1.0 / hw
    # Per-image squeeze/excite tail, statically unrolled (nb is small).  Lane slices are
    # at multiples of HW (itself a multiple of 128), so they are layout-clean.
    for b in range(nb):
        lo = b * hw
        tb = t2[:, lo:lo + hw]                                    # (C, HW)

        # AdaptiveAvgPool2d(1): mean over the spatial (lane) axis.
        y = jnp.sum(tb, axis=1, keepdims=True) * inv_hw           # (C, 1)

        # Channel-attention MLP on the VPU (far too small for the MXU).
        h = jnp.sum(wc1_ref[...] * y, axis=0, keepdims=True) + bc1_ref[...]   # (1, Cr)
        h = jnp.maximum(h, 0.0)
        s = jnp.sum(wc2_ref[...] * h, axis=1, keepdims=True) + bc2_ref[...]   # (C, 1)
        s = jax.nn.sigmoid(s)

        # channel-wise scale + residual, lane-dense store.
        o_ref[0, :, lo:lo + hw] = (x_ref[0, :, lo:lo + hw] + tb * s).astype(o_ref.dtype)


def _images_per_step(n, c, hw, vmem_budget_bytes=16 << 20):
    """Largest per-step image count that keeps >=2 grid steps, divides N evenly and
    stays under a conservative double-buffered VMEM budget."""
    # bf16 patches (9C*HW*2) + f32 residual (C*HW*4) + f32 output (C*HW*4), double-buffered.
    per_image = 2 * (9 * c * hw * 2 + 2 * c * hw * 4)
    nb = min(n // 2 if n >= 2 else 1, max(1, vmem_budget_bytes // per_image))
    nb = max(1, nb)
    while n % nb:
        nb -= 1
    return nb


def ca_layer(x_nchw, w_conv1, w_ca1, b_ca1, w_ca2, b_ca2, *, images_per_step=None):
    """x_nchw: (N, C, H, W) float32.  Weights in PyTorch layouts:
       w_conv1 (C, C, 3, 3), w_ca1 (Cr, C, 1, 1), b_ca1 (Cr,),
       w_ca2 (C, Cr, 1, 1), b_ca2 (C,)."""
    N, C, H, W = x_nchw.shape
    Cr = w_ca1.shape[0]
    HW = H * W

    if images_per_step is None:
        images_per_step = _images_per_step(N, C, HW)
    NB = images_per_step
    steps = N // NB

    # im2col in the wrapper (cheap XLA op; see TODO for the in-kernel-taps version):
    # patches[s, tap*C + ci, b*HW + h*W + w] = xpad[s*NB + b, ci, h + dh, w + dw]
    xpad = jnp.pad(x_nchw, ((0, 0), (0, 0), (1, 1), (1, 1)))
    taps = [xpad[:, :, dh:dh + H, dw:dw + W] for dh in range(3) for dw in range(3)]
    patches = (jnp.stack(taps, axis=1)                    # (N, 9, C, H, W)
               .reshape(steps, NB, 9 * C, HW)
               .transpose(0, 2, 1, 3)                     # (steps, 9C, NB, HW)
               .reshape(steps, 9 * C, NB * HW)
               .astype(jnp.bfloat16))

    # (Cout, Cin, 3, 3) -> (Cout, kh, kw, Cin) -> (Cout, 9*Cin), matching (tap, ci).
    w1 = jnp.transpose(w_conv1, (0, 2, 3, 1)).reshape(C, 9 * C).astype(jnp.bfloat16)

    # Residual inputs, same (steps, C, NB*HW) column ordering as the patches.
    x_res = (x_nchw.reshape(steps, NB, C, HW)
             .transpose(0, 2, 1, 3)
             .reshape(steps, C, NB * HW))

    wc1 = jnp.transpose(w_ca1.reshape(Cr, C), (1, 0))     # (C, Cr)
    bc1 = b_ca1.reshape(1, Cr)
    wc2 = w_ca2.reshape(C, Cr)                            # (C, Cr)
    bc2 = b_ca2.reshape(C, 1)

    kernel = functools.partial(ca_layer_kernel, nb=NB, hw=HW)

    out = pl.pallas_call(
        kernel,
        out_shape=jax.ShapeDtypeStruct((steps, C, NB * HW), x_nchw.dtype),
        grid=(steps,),
        in_specs=[
            pl.BlockSpec((1, 9 * C, NB * HW), lambda n: (n, 0, 0)),
            pl.BlockSpec((C, 9 * C), lambda n: (0, 0)),
            pl.BlockSpec((1, C, NB * HW), lambda n: (n, 0, 0)),
            pl.BlockSpec((C, Cr), lambda n: (0, 0)),
            pl.BlockSpec((1, Cr), lambda n: (0, 0)),
            pl.BlockSpec((C, Cr), lambda n: (0, 0)),
            pl.BlockSpec((C, 1), lambda n: (0, 0)),
        ],
        out_specs=pl.BlockSpec((1, C, NB * HW), lambda n: (n, 0, 0)),
        # residual input (index 2) shares shape/dtype/blocking with the output -> alias.
        input_output_aliases={2: 0},
        compiler_params=pltpu.CompilerParams(
            dimension_semantics=("parallel",),
            # Re-derive when scaling H, W, C (v7x physical VMEM is only 64 MiB).
            vmem_limit_bytes=32 * 1024 * 1024,
        ),
    )(patches, w1, x_res, wc1, bc1, wc2, bc2)

    # Undo the per-step image packing (no-op transposes when NB == 1).
    return (out.reshape(steps, C, NB, HW)
            .transpose(0, 2, 1, 3)
            .reshape(N, C, H, W))


def ca_layer_ref(x, w_conv1, w_ca1, b_ca1, w_ca2, b_ca2):
    """Pure-JAX NCHW reference matching the PyTorch module (full f32)."""
    dn = ('NCHW', 'OIHW', 'NCHW')
    t1 = jax.lax.conv_general_dilated(x, w_conv1, (1, 1), 'SAME',
                                      dimension_numbers=dn)
    t2 = jnp.maximum(t1, 0.0)
    y = jnp.mean(t2, axis=(2, 3), keepdims=True)
    h = jax.lax.conv_general_dilated(y, w_ca1, (1, 1), 'VALID',
                                     dimension_numbers=dn) + b_ca1.reshape(1, -1, 1, 1)
    h = jnp.maximum(h, 0.0)
    s = jax.lax.conv_general_dilated(h, w_ca2, (1, 1), 'VALID',
                                     dimension_numbers=dn) + b_ca2.reshape(1, -1, 1, 1)
    s = jax.nn.sigmoid(s)
    return x + t2 * s


if __name__ == "__main__":
    # N=4 so two images are packed per grid step while keeping 2 parallel grid steps.
    N, C, H, W = 4, 16, 16, 16          # channel must be divisible by 8 (C // 8 squeeze)
    Cr = C // 8

    key = jax.random.PRNGKey(0)
    kx, k1, k2, k3, k4, k5 = jax.random.split(key, 6)

    x = jax.random.normal(kx, (N, C, H, W), dtype=jnp.float32)
    w_conv1 = jax.random.normal(k1, (C, C, 3, 3), dtype=jnp.float32) * 0.1
    w_ca1 = jax.random.normal(k2, (Cr, C, 1, 1), dtype=jnp.float32) * 0.1
    b_ca1 = jax.random.normal(k3, (Cr,), dtype=jnp.float32) * 0.1
    w_ca2 = jax.random.normal(k4, (C, Cr, 1, 1), dtype=jnp.float32) * 0.1
    b_ca2 = jax.random.normal(k5, (C,), dtype=jnp.float32) * 0.1

    ca = jax.jit(ca_layer)              # fuse wrapper-side pad/stack/transpose with the call
    out = jax.block_until_ready(ca(x, w_conv1, w_ca1, b_ca1, w_ca2, b_ca2))
    ref = jax.block_until_ready(ca_layer_ref(x, w_conv1, w_ca1, b_ca1, w_ca2, b_ca2))

    assert out.shape == (N, C, H, W)
    # Tolerance accounts for bf16 conv-matmul inputs (f32 accumulation) vs f32 reference.
    np.testing.assert_allclose(np.asarray(out), np.asarray(ref), rtol=5e-2, atol=5e-2)
    print("KERNEL_OK")
</pallas_src>

<mosaic_0001>
module attributes {stable_mosaic.version = 11 : i64} {
  func.func @ca_layer_kernel(%arg0: i32, %arg1: memref<1x144x512xbf16, #tpu.memory_space<vmem>>, %arg2: memref<16x144xbf16, #tpu.memory_space<vmem>>, %arg3: memref<1x16x512xf32, #tpu.memory_space<vmem>>, %arg4: memref<16x2xf32, #tpu.memory_space<vmem>>, %arg5: memref<1x2xf32, #tpu.memory_space<vmem>>, %arg6: memref<16x2xf32, #tpu.memory_space<vmem>>, %arg7: memref<16x1xf32, #tpu.memory_space<vmem>>, %arg8: memref<1x16x512xf32, #tpu.memory_space<vmem>>) attributes {dimension_semantics = [#tpu.dimension_semantics<parallel>], iteration_bounds = array<i64: 2>, scalar_prefetch = 0 : i64, scratch_operands = 0 : i64, tpu.core_type = #tpu.core_type<tc>, window_params = [{transform_indices = @transform_0, window_bounds = array<i64: 1, 144, 512>}, {pipeline_mode = #tpu.pipeline_mode<synchronous>, transform_indices = @transform_1, window_bounds = array<i64: 16, 144>}, {transform_indices = @transform_2, window_bounds = array<i64: 1, 16, 512>}, {pipeline_mode = #tpu.pipeline_mode<synchronous>, transform_indices = @transform_3, window_bounds = array<i64: 16, 2>}, {pipeline_mode = #tpu.pipeline_mode<synchronous>, transform_indices = @transform_4, window_bounds = array<i64: 1, 2>}, {pipeline_mode = #tpu.pipeline_mode<synchronous>, transform_indices = @transform_5, window_bounds = array<i64: 16, 2>}, {pipeline_mode = #tpu.pipeline_mode<synchronous>, transform_indices = @transform_6, window_bounds = array<i64: 16, 1>}, {transform_indices = @transform_7, window_bounds = array<i64: 1, 16, 512>}]} {
    %c0 = arith.constant 0 : index
    %c0_0 = arith.constant 0 : index
    %0 = vector.load %arg2[%c0, %c0_0] : memref<16x144xbf16, #tpu.memory_space<vmem>>, vector<16x144xbf16>
    %c0_1 = arith.constant 0 : index
    %c0_2 = arith.constant 0 : index
    %c0_3 = arith.constant 0 : index
    %1 = vector.load %arg1[%c0_1, %c0_2, %c0_3] : memref<1x144x512xbf16, #tpu.memory_space<vmem>>, vector<1x144x512xbf16>
    %2 = vector.shape_cast %1 : vector<1x144x512xbf16> to vector<144x512xbf16>
    %cst = arith.constant dense<0.000000e+00> : vector<16x512xf32>
    %3 = tpu.matmul %0, %2, %cst {dimension_numbers = #tpu.dot_dimension_numbers<[1], [0], [0], [1], [0, 0, 1, 1], [], []>} : vector<16x144xbf16>, vector<144x512xbf16>, vector<16x512xf32> -> vector<16x512xf32>
    %cst_4 = arith.constant 0.000000e+00 : f32
    %4 = vector.broadcast %cst_4 : f32 to vector<16x512xf32>
    %5 = arith.maximumf %3, %4 : vector<16x512xf32>
    %6 = vector.extract_strided_slice %5 {offsets = [0, 0], sizes = [16, 256], strides = [1, 1]} : vector<16x512xf32> to vector<16x256xf32>
    %cst_5 = arith.constant dense<0.000000e+00> : vector<16xf32>
    %7 = vector.multi_reduction <add>, %6, %cst_5 [1] : vector<16x256xf32> to vector<16xf32>
    %8 = vector.shape_cast %7 : vector<16xf32> to vector<16x1xf32>
    %cst_6 = arith.constant 3.906250e-03 : f32
    %9 = vector.broadcast %cst_6 : f32 to vector<16x1xf32>
    %10 = arith.mulf %8, %9 : vector<16x1xf32>
    %c0_7 = arith.constant 0 : index
    %c0_8 = arith.constant 0 : index
    %11 = vector.load %arg4[%c0_7, %c0_8] : memref<16x2xf32, #tpu.memory_space<vmem>>, vector<16x2xf32>
    %12 = vector.broadcast %10 : vector<16x1xf32> to vector<16x2xf32>
    %13 = arith.mulf %11, %12 : vector<16x2xf32>
    %cst_9 = arith.constant dense<0.000000e+00> : vector<2xf32>
    %14 = vector.multi_reduction <add>, %13, %cst_9 [0] : vector<16x2xf32> to vector<2xf32>
    %15 = vector.shape_cast %14 : vector<2xf32> to vector<1x2xf32>
    %c0_10 = arith.constant 0 : index
    %c0_11 = arith.constant 0 : index
    %16 = vector.load %arg5[%c0_10, %c0_11] : memref<1x2xf32, #tpu.memory_space<vmem>>, vector<1x2xf32>
    %17 = arith.addf %15, %16 : vector<1x2xf32>
    %cst_12 = arith.constant 0.000000e+00 : f32
    %18 = vector.broadcast %cst_12 : f32 to vector<1x2xf32>
    %19 = arith.maximumf %17, %18 : vector<1x2xf32>
    %c0_13 = arith.constant 0 : index
    %c0_14 = arith.constant 0 : index
    %20 = vector.load %arg6[%c0_13, %c0_14] : memref<16x2xf32, #tpu.memory_space<vmem>>, vector<16x2xf32>
    %21 = vector.broadcast %19 : vector<1x2xf32> to vector<16x2xf32>
    %22 = arith.mulf %20, %21 : vector<16x2xf32>
    %cst_15 = arith.constant dense<0.000000e+00> : vector<16xf32>
    %23 = vector.multi_reduction <add>, %22, %cst_15 [1] : vector<16x2xf32> to vector<16xf32>
    %24 = vector.shape_cast %23 : vector<16xf32> to vector<16x1xf32>
    %c0_16 = arith.constant 0 : index
    %c0_17 = arith.constant 0 : index
    %25 = vector.load %arg7[%c0_16, %c0_17] : memref<16x1xf32, #tpu.memory_space<vmem>>, vector<16x1xf32>
    %26 = arith.addf %24, %25 : vector<16x1xf32>
    %27 = arith.negf %26 : vector<16x1xf32>
    %28 = math.exp %27 : vector<16x1xf32>
    %cst_18 = arith.constant 1.000000e+00 : f32
    %29 = vector.broadcast %cst_18 : f32 to vector<16x1xf32>
    %30 = arith.addf %29, %28 : vector<16x1xf32>
    %31 = arith.divf %29, %30 : vector<16x1xf32>
    %c0_19 = arith.constant 0 : index
    %c0_20 = arith.constant 0 : index
    %c0_21 = arith.constant 0 : index
    %32 = vector.load %arg3[%c0_19, %c0_20, %c0_21] : memref<1x16x512xf32, #tpu.memory_space<vmem>>, vector<1x16x256xf32>
    %33 = vector.shape_cast %32 : vector<1x16x256xf32> to vector<16x256xf32>
    %34 = vector.broadcast %31 : vector<16x1xf32> to vector<16x256xf32>
    %35 = arith.mulf %6, %34 : vector<16x256xf32>
    %36 = arith.addf %33, %35 : vector<16x256xf32>
    %c0_22 = arith.constant 0 : index
    %c0_23 = arith.constant 0 : index
    %c0_24 = arith.constant 0 : index
    %37 = vector.load %arg8[%c0_22, %c0_23, %c0_24] : memref<1x16x512xf32, #tpu.memory_space<vmem>>, vector<1x16x256xf32>
    %38 = vector.shape_cast %37 : vector<1x16x256xf32> to vector<16x256xf32>
    %39 = vector.shape_cast %36 : vector<16x256xf32> to vector<1x16x256xf32>
    tpu.vector_store %arg8[%c0_22, %c0_23, %c0_24], %39 {strides = array<i32>} : memref<1x16x512xf32, #tpu.memory_space<vmem>>, vector<1x16x256xf32>,
    %40 = vector.extract_strided_slice %5 {offsets = [0, 256], sizes = [16, 256], strides = [1, 1]} : vector<16x512xf32> to vector<16x256xf32>
    %cst_25 = arith.constant dense<0.000000e+00> : vector<16xf32>
    %41 = vector.multi_reduction <add>, %40, %cst_25 [1] : vector<16x256xf32> to vector<16xf32>
    %42 = vector.shape_cast %41 : vector<16xf32> to vector<16x1xf32>
    %cst_26 = arith.constant 3.906250e-03 : f32
    %43 = vector.broadcast %cst_26 : f32 to vector<16x1xf32>
    %44 = arith.mulf %42, %43 : vector<16x1xf32>
    %c0_27 = arith.constant 0 : index
    %c0_28 = arith.constant 0 : index
    %45 = vector.load %arg4[%c0_27, %c0_28] : memref<16x2xf32, #tpu.memory_space<vmem>>, vector<16x2xf32>
    %46 = vector.broadcast %44 : vector<16x1xf32> to vector<16x2xf32>
    %47 = arith.mulf %45, %46 : vector<16x2xf32>
    %cst_29 = arith.constant dense<0.000000e+00> : vector<2xf32>
    %48 = vector.multi_reduction <add>, %47, %cst_29 [0] : vector<16x2xf32> to vector<2xf32>
    %49 = vector.shape_cast %48 : vector<2xf32> to vector<1x2xf32>
    %c0_30 = arith.constant 0 : index
    %c0_31 = arith.constant 0 : index
    %50 = vector.load %arg5[%c0_30, %c0_31] : memref<1x2xf32, #tpu.memory_space<vmem>>, vector<1x2xf32>
    %51 = arith.addf %49, %50 : vector<1x2xf32>
    %cst_32 = arith.constant 0.000000e+00 : f32
    %52 = vector.broadcast %cst_32 : f32 to vector<1x2xf32>
    %53 = arith.maximumf %51, %52 : vector<1x2xf32>
    %c0_33 = arith.constant 0 : index
    %c0_34 = arith.constant 0 : index
    %54 = vector.load %arg6[%c0_33, %c0_34] : memref<16x2xf32, #tpu.memory_space<vmem>>, vector<16x2xf32>
    %55 = vector.broadcast %53 : vector<1x2xf32> to vector<16x2xf32>
    %56 = arith.mulf %54, %55 : vector<16x2xf32>
    %cst_35 = arith.constant dense<0.000000e+00> : vector<16xf32>
    %57 = vector.multi_reduction <add>, %56, %cst_35 [1] : vector<16x2xf32> to vector<16xf32>
    %58 = vector.shape_cast %57 : vector<16xf32> to vector<16x1xf32>
    %c0_36 = arith.constant 0 : index
    %c0_37 = arith.constant 0 : index
    %59 = vector.load %arg7[%c0_36, %c0_37] : memref<16x1xf32, #tpu.memory_space<vmem>>, vector<16x1xf32>
    %60 = arith.addf %58, %59 : vector<16x1xf32>
    %61 = arith.negf %60 : vector<16x1xf32>
    %62 = math.exp %61 : vector<16x1xf32>
    %cst_38 = arith.constant 1.000000e+00 : f32
    %63 = vector.broadcast %cst_38 : f32 to vector<16x1xf32>
    %64 = arith.addf %63, %62 : vector<16x1xf32>
    %65 = arith.divf %63, %64 : vector<16x1xf32>
    %c0_39 = arith.constant 0 : index
    %c0_40 = arith.constant 0 : index
    %c256 = arith.constant 256 : index
    %66 = vector.load %arg3[%c0_39, %c0_40, %c256] : memref<1x16x512xf32, #tpu.memory_space<vmem>>, vector<1x16x256xf32>
    %67 = vector.shape_cast %66 : vector<1x16x256xf32> to vector<16x256xf32>
    %68 = vector.broadcast %65 : vector<16x1xf32> to vector<16x256xf32>
    %69 = arith.mulf %40, %68 : vector<16x256xf32>
    %70 = arith.addf %67, %69 : vector<16x256xf32>
    %c0_41 = arith.constant 0 : index
    %c0_42 = arith.constant 0 : index
    %c256_43 = arith.constant 256 : index
    %71 = vector.load %arg8[%c0_41, %c0_42, %c256_43] : memref<1x16x512xf32, #tpu.memory_space<vmem>>, vector<1x16x256xf32>
    %72 = vector.shape_cast %71 : vector<1x16x256xf32> to vector<16x256xf32>
    %73 = vector.shape_cast %70 : vector<16x256xf32> to vector<1x16x256xf32>
    tpu.vector_store %arg8[%c0_41, %c0_42, %c256_43], %73 {strides = array<i32>} : memref<1x16x512xf32, #tpu.memory_space<vmem>>, vector<1x16x256xf32>,
    return
  }
  func.func @transform_0(%arg0: i32) -> (i32, i32, i32) {
    %c0_i32 = arith.constant 0 : i32
    %c0_i32_0 = arith.constant 0 : i32
    %c0_i32_1 = arith.constant 0 : i32
    return %arg0, %c0_i32, %c0_i32_0 : i32, i32, i32
  }
  func.func @transform_1(%arg0: i32) -> (i32, i32) {
    %c0_i32 = arith.constant 0 : i32
    %c0_i32_0 = arith.constant 0 : i32
    %c0_i32_1 = arith.constant 0 : i32
    return %c0_i32, %c0_i32_0 : i32, i32
  }
  func.func @transform_2(%arg0: i32) -> (i32, i32, i32) {
    %c0_i32 = arith.constant 0 : i32
    %c0_i32_0 = arith.constant 0 : i32
    %c0_i32_1 = arith.constant 0 : i32
    return %arg0, %c0_i32, %c0_i32_0 : i32, i32, i32
  }
  func.func @transform_3(%arg0: i32) -> (i32, i32) {
    %c0_i32 = arith.constant 0 : i32
    %c0_i32_0 = arith.constant 0 : i32
    %c0_i32_1 = arith.constant 0 : i32
    return %c0_i32, %c0_i32_0 : i32, i32
  }
  func.func @transform_4(%arg0: i32) -> (i32, i32) {
    %c0_i32 = arith.constant 0 : i32
    %c0_i32_0 = arith.constant 0 : i32
    %c0_i32_1 = arith.constant 0 : i32
    return %c0_i32, %c0_i32_0 : i32, i32
  }
  func.func @transform_5(%arg0: i32) -> (i32, i32) {
    %c0_i32 = arith.constant 0 : i32
    %c0_i32_0 = arith.constant 0 : i32
    %c0_i32_1 = arith.constant 0 : i32
    return %c0_i32, %c0_i32_0 : i32, i32
  }
  func.func @transform_6(%arg0: i32) -> (i32, i32) {
    %c0_i32 = arith.constant 0 : i32
    %c0_i32_0 = arith.constant 0 : i32
    %c0_i32_1 = arith.constant 0 : i32
    return %c0_i32, %c0_i32_0 : i32, i32
  }
  func.func @transform_7(%arg0: i32) -> (i32, i32, i32) {
    %c0_i32 = arith.constant 0 : i32
    %c0_i32_0 = arith.constant 0 : i32
    %c0_i32_1 = arith.constant 0 : i32
    return %arg0, %c0_i32, %c0_i32_0 : i32, i32, i32
  }
}

</mosaic_0001>

<llo_original>
// kernel: ca_layer.1
$region0: #{ca_layer.1}
  #allocation0 [shape = 'u32[]', space=smem, size = 0x4, offset = 0x4, fixed_abs, tag = 'smem constant byte address 0x4 - core index']
  #allocation1 [shape = 'u32[144,128]{1,0:T(1,128)}', space=vmem, size = 0x12000, scoped, tag = 'internal scratch']
  %s0 = inlined_call_operand.vmem [shape: bf16[2,144,512], index: 0, kind: input, shape index: {}]
  %s1 = inlined_call_operand.vmem [shape: bf16[16,144], index: 1, kind: input, shape index: {}]
  %s2 = inlined_call_operand.vmem [shape: f32[2,16,512], index: 2, kind: input, shape index: {}, may-alias: {2,7}]
  %s3 = inlined_call_operand.vmem [shape: f32[16,2], index: 3, kind: input, shape index: {}]
  %s4 = inlined_call_operand.vmem [shape: f32[1,2], index: 4, kind: input, shape index: {}]
  %s5 = inlined_call_operand.vmem [shape: f32[16,2], index: 5, kind: input, shape index: {}]
  %s6 = inlined_call_operand.vmem [shape: f32[16,1], index: 6, kind: input, shape index: {}]
  %s7 = inlined_call_operand.vmem [shape: f32[2,16,512], index: 7, kind: output, shape index: {}, may-alias: {2,7}]
  %s8 = sld [smem:[#allocation0]]
  $region61: #{ca_layer.1} parent=0
    _
  %s10 = ssub.s32 1, %s8
  %s11 = scalar_select 0, %s10, %s8
  loop: start=0, step=1, limit=4
  $region2: #{ca_layer.1} parent=0 // loop_pre_header
    _
  $region3: #{ca_layer.1} parent=0 // loop_header
    %s13 = sphi 0, %s17
    %p14 = scmp.ge.s32.totalorder %s13, 4
    %s23 = sphi 0, %s25
    %s26 = sphi 0, %s23
    %s27 = sphi 0, %s26
    %s43 = sphi 0, %s27
    %s47 = sphi 0, %s47
    %s49 = sphi 0, %s47
    %s50 = sphi 0, %s49
    %s64 = sphi 0, %s50
    %s70 = sphi 0, %s72
    %s73 = sphi 0, %s70
    %s74 = sphi 0, %s73
    %s90 = sphi 0, %s74
    %s94 = sphi 0, %s94
    %s96 = sphi 0, %s94
    %s97 = sphi 0, %s96
    %s111 = sphi 0, %s97
    %s115 = sphi 0, %s115
    %s117 = sphi 0, %s115
    %s118 = sphi 0, %s117
    %s132 = sphi 0, %s118
    %s136 = sphi 0, %s136
    %s138 = sphi 0, %s136
    %s139 = sphi 0, %s138
    %s153 = sphi 0, %s139
    %s157 = sphi 0, %s157
    %s159 = sphi 0, %s157
    %s160 = sphi 0, %s159
    %s174 = sphi 0, %s160
    %s180 = sphi 0, %s182
    %s183 = sphi 0, %s180
    %s184 = sphi 0, %s183
    %s200 = sphi 0, %s184
  $region4: #{ca_layer.1} parent=0 // loop_header_branch
    %16 = sbr.rel (%p14) target = $region8
  $region5: #{ca_layer.1} parent=0 // loop_body
    %s18 = ssub.s32 %s13, 1
    %s19 = ssub.s32 %s13, 2
    %s20 = sadd.s32 %s13, 1
    %s21 = ssub.s32 %s13, %s20
    %p22 = scmp.eq.s32.totalorder %s21, 0
    %s24 = sadd.s32 %s23, 1
    %s25 = scalar_select %p22, %s23, %s24
    %p28 = pneg %p22
    %p29 = scmp.eq.s32.totalorder %s13, 1
    %p30 = por %p28, %p29
    %p31 = scmp.ne.s32.totalorder %s23, %s26
    %p32 = scmp.eq.s32.totalorder %s13, 0
    %p33 = por %p31, %p32
    %p34 = scmp.ne.s32.totalorder %s23, %s26
    %p35 = scmp.eq.s32.totalorder %s18, 1
    %p36 = por %p34, %p35
    %p37 = scmp.ne.s32.totalorder %s26, %s27
    %p38 = scmp.eq.s32.totalorder %s18, 0
    %p39 = por %p37, %p38
    %p40 = scmp.ne.s32.totalorder %s26, %s27
    %p41 = scmp.eq.s32.totalorder %s19, 1
    %p42 = por %p40, %p41
    %p44 = scmp.ne.s32.totalorder %s27, %s43
    %p45 = scmp.eq.s32.totalorder %s19, 0
    %p46 = por %p44, %p45
    %s48 = sadd.s32 %s47, 1
    %p51 = scmp.eq.s32.totalorder %s13, 1
    %p52 = scmp.ne.s32.totalorder %s47, %s49
    %p53 = scmp.eq.s32.totalorder %s13, 0
    %p54 = por %p52, %p53
    %p55 = scmp.ne.s32.totalorder %s47, %s49
    %p56 = scmp.eq.s32.totalorder %s18, 1
    %p57 = por %p55, %p56
    %p58 = scmp.ne.s32.totalorder %s49, %s50
    %p59 = scmp.eq.s32.totalorder %s18, 0
    %p60 = por %p58, %p59
    %p61 = scmp.ne.s32.totalorder %s49, %s50
    %p62 = scmp.eq.s32.totalorder %s19, 1
    %p63 = por %p61, %p62
    %p65 = scmp.ne.s32.totalorder %s50, %s64
    %p66 = scmp.eq.s32.totalorder %s19, 0
    %p67 = por %p65, %p66
    %s68 = ssub.s32 %s13, %s20
    %p69 = scmp.eq.s32.totalorder %s68, 0
    %s71 = sadd.s32 %s70, 1
    %s72 = scalar_select %p69, %s70, %s71
    %p75 = pneg %p69
    %p76 = scmp.eq.s32.totalorder %s13, 1
    %p77 = por %p75, %p76
    %p78 = scmp.ne.s32.totalorder %s70, %s73
    %p79 = scmp.eq.s32.totalorder %s13, 0
    %p80 = por %p78, %p79
    %p81 = scmp.ne.s32.totalorder %s70, %s73
    %p82 = scmp.eq.s32.totalorder %s18, 1
    %p83 = por %p81, %p82
    %p84 = scmp.ne.s32.totalorder %s73, %s74
    %p85 = scmp.eq.s32.totalorder %s18, 0
    %p86 = por %p84, %p85
    %p87 = scmp.ne.s32.totalorder %s73, %s74
    %p88 = scmp.eq.s32.totalorder %s19, 1
    %p89 = por %p87, %p88
    %p91 = scmp.ne.s32.totalorder %s74, %s90
    %p92 = scmp.eq.s32.totalorder %s19, 0
    %p93 = por %p91, %p92
    %s95 = sadd.s32 %s94, 1
    %p98 = scmp.eq.s32.totalorder %s13, 1
    %p99 = scmp.ne.s32.totalorder %s94, %s96
    %p100 = scmp.eq.s32.totalorder %s13, 0
    %p101 = por %p99, %p100
    %p102 = scmp.ne.s32.totalorder %s94, %s96
    %p103 = scmp.eq.s32.totalorder %s18, 1
    %p104 = por %p102, %p103
    %p105 = scmp.ne.s32.totalorder %s96, %s97
    %p106 = scmp.eq.s32.totalorder %s18, 0
    %p107 = por %p105, %p106
    %p108 = scmp.ne.s32.totalorder %s96, %s97
    %p109 = scmp.eq.s32.totalorder %s19, 1
    %p110 = por %p108, %p109
    %p112 = scmp.ne.s32.totalorder %s97, %s111
    %p113 = scmp.eq.s32.totalorder %s19, 0
    %p114 = por %p112, %p113
    %s116 = sadd.s32 %s115, 1
    %p119 = scmp.eq.s32.totalorder %s13, 1
    %p120 = scmp.ne.s32.totalorder %s115, %s117
    %p121 = scmp.eq.s32.totalorder %s13, 0
    %p122 = por %p120, %p121
    %p123 = scmp.ne.s32.totalorder %s115, %s117
    %p124 = scmp.eq.s32.totalorder %s18, 1
    %p125 = por %p123, %p124
    %p126 = scmp.ne.s32.totalorder %s117, %s118
    %p127 = scmp.eq.s32.totalorder %s18, 0
    %p128 = por %p126, %p127
    %p129 = scmp.ne.s32.totalorder %s117, %s118
    %p130 = scmp.eq.s32.totalorder %s19, 1
    %p131 = por %p129, %p130
    %p133 = scmp.ne.s32.totalorder %s118, %s132
    %p134 = scmp.eq.s32.totalorder %s19, 0
    %p135 = por %p133, %p134
    %s137 = sadd.s32 %s136, 1
    %p140 = scmp.eq.s32.totalorder %s13, 1
    %p141 = scmp.ne.s32.totalorder %s136, %s138
    %p142 = scmp.eq.s32.totalorder %s13, 0
    %p143 = por %p141, %p142
    %p144 = scmp.ne.s32.totalorder %s136, %s138
    %p145 = scmp.eq.s32.totalorder %s18, 1
    %p146 = por %p144, %p145
    %p147 = scmp.ne.s32.totalorder %s138, %s139
    %p148 = scmp.eq.s32.totalorder %s18, 0
    %p149 = por %p147, %p148
    %p150 = scmp.ne.s32.totalorder %s138, %s139
    %p151 = scmp.eq.s32.totalorder %s19, 1
    %p152 = por %p150, %p151
    %p154 = scmp.ne.s32.totalorder %s139, %s153
    %p155 = scmp.eq.s32.totalorder %s19, 0
    %p156 = por %p154, %p155
    %s158 = sadd.s32 %s157, 1
    %p161 = scmp.eq.s32.totalorder %s13, 1
    %p162 = scmp.ne.s32.totalorder %s157, %s159
    %p163 = scmp.eq.s32.totalorder %s13, 0
    %p164 = por %p162, %p163
    %p165 = scmp.ne.s32.totalorder %s157, %s159
    %p166 = scmp.eq.s32.totalorder %s18, 1
    %p167 = por %p165, %p166
    %p168 = scmp.ne.s32.totalorder %s159, %s160
    %p169 = scmp.eq.s32.totalorder %s18, 0
    %p170 = por %p168, %p169
    %p171 = scmp.ne.s32.totalorder %s159, %s160
    %p172 = scmp.eq.s32.totalorder %s19, 1
    %p173 = por %p171, %p172
    %p175 = scmp.ne.s32.totalorder %s160, %s174
    %p176 = scmp.eq.s32.totalorder %s19, 0
    %p177 = por %p175, %p176
    %s178 = ssub.s32 %s13, %s20
    %p179 = scmp.eq.s32.totalorder %s178, 0
    %s181 = sadd.s32 %s180, 1
    %s182 = scalar_select %p179, %s180, %s181
    %p185 = pneg %p179
    %p186 = scmp.eq.s32.totalorder %s13, 1
    %p187 = por %p185, %p186
    %p188 = scmp.ne.s32.totalorder %s180, %s183
    %p189 = scmp.eq.s32.totalorder %s13, 0
    %p190 = por %p188, %p189
    %p191 = scmp.ne.s32.totalorder %s180, %s183
    %p192 = scmp.eq.s32.totalorder %s18, 1
    %p193 = por %p191, %p192
    %p194 = scmp.ne.s32.totalorder %s183, %s184
    %p195 = scmp.eq.s32.totalorder %s18, 0
    %p196 = por %p194, %p195
    %p197 = scmp.ne.s32.totalorder %s183, %s184
    %p198 = scmp.eq.s32.totalorder %s19, 1
    %p199 = por %p197, %p198
    %p201 = scmp.ne.s32.totalorder %s184, %s200
    %p202 = scmp.eq.s32.totalorder %s19, 0
    %p203 = por %p201, %p202
    %p204 = scmp.le.s32.totalorder 1, %s13
    %p205 = scmp.lt.s32.totalorder %s13, 3
    %p206 = pnand %p204, %p205
    %p207 = pneg %p206
    // Predicated region
    $region9: #{ca_layer.1} parent=5 // pred_check
      _
    $region10: #{ca_layer.1} parent=5 // pred_check_branch
      %209 = sbr.rel (%p206) target = $region12
    $region11: #{ca_layer.1} parent=5 // pred_region
      %s210 = ssub.s32 %s13, 1
      // Predicated region
      $region13: #{ca_layer.1} parent=11 // pred_check
        %p211 = pneg %p60
      $region14: #{ca_layer.1} parent=11 // pred_check_branch
        %213 = sbr.rel (%p211) target = $region16
      $region15: #{ca_layer.1} parent=11 // pred_region
        _
      $region16: #{ca_layer.1} parent=11 // pred_fallthru
        _
      // Predicated region
      $region17: #{ca_layer.1} parent=11 // pred_check
        %p214 = pneg %p107
      $region18: #{ca_layer.1} parent=11 // pred_check_branch
        %216 = sbr.rel (%p214) target = $region20
      $region19: #{ca_layer.1} parent=11 // pred_region
        _
      $region20: #{ca_layer.1} parent=11 // pred_fallthru
        _
      // Predicated region
      $region21: #{ca_layer.1} parent=11 // pred_check
        %p217 = pneg %p128
      $region22: #{ca_layer.1} parent=11 // pred_check_branch
        %219 = sbr.rel (%p217) target = $region24
      $region23: #{ca_layer.1} parent=11 // pred_region
        _
      $region24: #{ca_layer.1} parent=11 // pred_fallthru
        _
      // Predicated region
      $region25: #{ca_layer.1} parent=11 // pred_check
        %p220 = pneg %p149
      $region26: #{ca_layer.1} parent=11 // pred_check_branch
        %222 = sbr.rel (%p220) target = $region28
      $region27: #{ca_layer.1} parent=11 // pred_region
        _
      $region28: #{ca_layer.1} parent=11 // pred_fallthru
        _
      // Predicated region
      $region29: #{ca_layer.1} parent=11 // pred_check
        %p223 = pneg %p170
      $region30: #{ca_layer.1} parent=11 // pred_check_branch
        %225 = sbr.rel (%p223) target = $region32
      $region31: #{ca_layer.1} parent=11 // pred_region
        _
      $region32: #{ca_layer.1} parent=11 // pred_fallthru
        _
    $region12: #{ca_layer.1} parent=5 // pred_fallthru
      _
    %p226 = scmp.lt.s32.totalorder %s13, 2
    // Predicated region
    $region33: #{ca_layer.1} parent=5 // pred_check
      %p227 = pneg %p226
    $region34: #{ca_layer.1} parent=5 // pred_check_branch
      %229 = sbr.rel (%p227) target = $region36
    $region35: #{ca_layer.1} parent=5 // pred_region
      // Predicated region
      $region37: #{ca_layer.1} parent=35 // pred_check
        %p230 = pneg %p33
      $region38: #{ca_layer.1} parent=35 // pred_check_branch
        %232 = sbr.rel (%p230) target = $region40
      $region39: #{ca_layer.1} parent=35 // pred_region
        %p233 = scmp.lt.s32.totalorder %s13, 1
        %s234 = scalar_select %p233, %s13, 1
        %s235 = smul.addr %s234, 72
        %s236 = smul.addr %s235, 4
        %s237 = scalar_lea.vmem %s0, %s236
      $region40: #{ca_layer.1} parent=35 // pred_fallthru
        _
      // Predicated region
      $region41: #{ca_layer.1} parent=35 // pred_check
        %p238 = pneg %p80
      $region42: #{ca_layer.1} parent=35 // pred_check_branch
        %240 = sbr.rel (%p238) target = $region44
      $region43: #{ca_layer.1} parent=35 // pred_region
        %p241 = scmp.lt.s32.totalorder %s13, 1
        %s242 = scalar_select %p241, %s13, 1
        %s243 = smul.addr %s242, 8
        %s244 = smul.addr %s243, 8
        %s245 = scalar_lea.vmem %s2, %s244
      $region44: #{ca_layer.1} parent=35 // pred_fallthru
        _
    $region36: #{ca_layer.1} parent=5 // pred_fallthru
      _
    %p246 = scmp.le.s32.totalorder 1, %s13
    %p247 = scmp.lt.s32.totalorder %s13, 3
    %p248 = pnand %p246, %p247
    %p249 = pneg %p248
    // Predicated region
    $region45: #{ca_layer.1} parent=5 // pred_check
      _
    $region46: #{ca_layer.1} parent=5 // pred_check_branch
      %251 = sbr.rel (%p248) target = $region48
    $region47: #{ca_layer.1} parent=5 // pred_region
      %s252 = ssub.s32 %s13, 1
      %p253 = scmp.lt.s32.totalorder %s18, 1
      %s254 = scalar_select %p253, %s18, 1
      %s255 = smul.addr %s254, 72
      %s256 = smul.addr %s255, 4
      %s257 = scalar_lea.vmem %s0, %s256
      %p258 = pneg %p39
      %p259 = pneg %p36
      %p260 = pneg %p60
      %p261 = pneg %p57
      %p262 = scmp.lt.s32.totalorder %s18, 1
      %s263 = scalar_select %p262, %s18, 1
      %s264 = smul.addr %s263, 8
      %s265 = smul.addr %s264, 8
      %s266 = scalar_lea.vmem %s2, %s265
      %p267 = pneg %p86
      %p268 = pneg %p83
      %p269 = pneg %p107
      %p270 = pneg %p104
      %p271 = pneg %p128
      %p272 = pneg %p125
      %p273 = pneg %p149
      %p274 = pneg %p146
      %p275 = pneg %p170
      %p276 = pneg %p167
      %p277 = pneg %p196
      %p278 = pneg %p193
      %p279 = scmp.lt.s32.totalorder %s18, 1
      %s280 = scalar_select %p279, %s18, 1
      %s281 = smul.addr %s280, 8
      %s282 = smul.addr %s281, 8
      %s283 = scalar_lea.vmem %s7, %s282
      %p284 = scmp.lt.s32.totalorder %s18, 1
      %s285 = scalar_select %p284, %s18, 1
      %s286 = smul.addr %s285, 72
      %s287 = smul.addr %s286, 4
      %s288 = scalar_lea.vmem %s0, %s287
      %p289 = scmp.lt.s32.totalorder %s18, 1
      %s290 = scalar_select %p289, %s18, 1
      %s291 = smul.addr %s290, 8
      %s292 = smul.addr %s291, 8
      %s293 = scalar_lea.vmem %s2, %s292
      %p294 = scmp.lt.s32.totalorder %s18, 1
      %s295 = scalar_select %p294, %s18, 1
      %s296 = smul.addr %s295, 8
      %s297 = smul.addr %s296, 8
      %s298 = scalar_lea.vmem %s7, %s297
      %v300 = vld [vmem:[%s1] sm:$0xff]
      %v301 = vld [vmem:[%s1 + $0x8] sm:$0xff]
      %v302 = vld [vmem:[%s288] sm:$0xff]
      %v303 = vld [vmem:[%s288 + $0x8] sm:$0xff]
      %v304 = vld [vmem:[%s288 + $0x10] sm:$0xff]
      %v305 = vld [vmem:[%s288 + $0x18] sm:$0xff]
      %v306 = vld [vmem:[%s288 + $0x20] sm:$0xff]
      %v307 = vld [vmem:[%s288 + $0x28] sm:$0xff]
      %v308 = vld [vmem:[%s288 + $0x30] sm:$0xff]
      %v309 = vld [vmem:[%s288 + $0x38] sm:$0xff]
      %v310 = vld [vmem:[%s288 + $0x40] sm:$0xff]
      %v311 = vld [vmem:[%s288 + $0x48] sm:$0xff]
      %v312 = vld [vmem:[%s288 + $0x50] sm:$0xff]
      %v313 = vld [vmem:[%s288 + $0x58] sm:$0xff]
      %v314 = vld [vmem:[%s288 + $0x60] sm:$0xff]
      %v315 = vld [vmem:[%s288 + $0x68] sm:$0xff]
      %v316 = vld [vmem:[%s288 + $0x70] sm:$0xff]
      %v317 = vld [vmem:[%s288 + $0x78] sm:$0xff]
      %v318 = vld [vmem:[%s288 + $0x80] sm:$0xff]
      %v319 = vld [vmem:[%s288 + $0x88] sm:$0xff]
      %v320 = vld [vmem:[%s288 + $0x90] sm:$0xff]
      %v321 = vld [vmem:[%s288 + $0x98] sm:$0xff]
      %v322 = vld [vmem:[%s288 + $0xa0] sm:$0xff]
      %v323 = vld [vmem:[%s288 + $0xa8] sm:$0xff]
      %v324 = vld [vmem:[%s288 + $0xb0] sm:$0xff]
      %v325 = vld [vmem:[%s288 + $0xb8] sm:$0xff]
      %v326 = vld [vmem:[%s288 + $0xc0] sm:$0xff]
      %v327 = vld [vmem:[%s288 + $0xc8] sm:$0xff]
      %v328 = vld [vmem:[%s288 + $0xd0] sm:$0xff]
      %v329 = vld [vmem:[%s288 + $0xd8] sm:$0xff]
      %v330 = vld [vmem:[%s288 + $0xe0] sm:$0xff]
      %v331 = vld [vmem:[%s288 + $0xe8] sm:$0xff]
      %v332 = vld [vmem:[%s288 + $0xf0] sm:$0xff]
      %v333 = vld [vmem:[%s288 + $0xf8] sm:$0xff]
      %v334 = vld [vmem:[%s288 + $0x100] sm:$0xff]
      %v335 = vld [vmem:[%s288 + $0x108] sm:$0xff]
      %v336 = vld [vmem:[%s288 + $0x110] sm:$0xff]
      %v337 = vld [vmem:[%s288 + $0x118] sm:$0xff]
      %v340 = vunpack.c.l.b16 %v300
      %v341 = vunpack.c.h.b16 %v300
      %v342 = vunpack.c.l.b16 %v301
      %v343 = vunpack.c.h.b16 %v301
      %v344 = vpack.c.b16 %v342, %v340
      %v345 = vpack.c.b16 %v343, %v341
      %v383 = vunpack.c.l.b16 %v302
      %v384 = vunpack.c.h.b16 %v302
      %v385 = vunpack.c.l.b16 %v303
      %v386 = vunpack.c.h.b16 %v303
      %v387 = vunpack.c.l.b16 %v304
      %v388 = vunpack.c.h.b16 %v304
      %v389 = vunpack.c.l.b16 %v305
      %v390 = vunpack.c.h.b16 %v305
      %v391 = vunpack.c.l.b16 %v306
      %v392 = vunpack.c.h.b16 %v306
      %v393 = vunpack.c.l.b16 %v307
      %v394 = vunpack.c.h.b16 %v307
      %v395 = vunpack.c.l.b16 %v308
      %v396 = vunpack.c.h.b16 %v308
      %v397 = vunpack.c.l.b16 %v309
      %v398 = vunpack.c.h.b16 %v309
      %v399 = vunpack.c.l.b16 %v310
      %v400 = vunpack.c.h.b16 %v310
      %v401 = vunpack.c.l.b16 %v311
      %v402 = vunpack.c.h.b16 %v311
      %v403 = vunpack.c.l.b16 %v312
      %v404 = vunpack.c.h.b16 %v312
      %v405 = vunpack.c.l.b16 %v313
      %v406 = vunpack.c.h.b16 %v313
      %v407 = vunpack.c.l.b16 %v314
      %v408 = vunpack.c.h.b16 %v314
      %v409 = vunpack.c.l.b16 %v315
      %v410 = vunpack.c.h.b16 %v315
      %v411 = vunpack.c.l.b16 %v316
      %v412 = vunpack.c.h.b16 %v316
      %v413 = vunpack.c.l.b16 %v317
      %v414 = vunpack.c.h.b16 %v317
      %v415 = vunpack.c.l.b16 %v318
      %v416 = vunpack.c.h.b16 %v318
      %v417 = vunpack.c.l.b16 %v319
      %v418 = vunpack.c.h.b16 %v319
      %v419 = vunpack.c.l.b16 %v320
      %v420 = vunpack.c.h.b16 %v320
      %v421 = vunpack.c.l.b16 %v321
      %v422 = vunpack.c.h.b16 %v321
      %v423 = vunpack.c.l.b16 %v322
      %v424 = vunpack.c.h.b16 %v322
      %v425 = vunpack.c.l.b16 %v323
      %v426 = vunpack.c.h.b16 %v323
      %v427 = vunpack.c.l.b16 %v324
      %v428 = vunpack.c.h.b16 %v324
      %v429 = vunpack.c.l.b16 %v325
      %v430 = vunpack.c.h.b16 %v325
      %v431 = vunpack.c.l.b16 %v326
      %v432 = vunpack.c.h.b16 %v326
      %v433 = vunpack.c.l.b16 %v327
      %v434 = vunpack.c.h.b16 %v327
      %v435 = vunpack.c.l.b16 %v328
      %v436 = vunpack.c.h.b16 %v328
      %v437 = vunpack.c.l.b16 %v329
      %v438 = vunpack.c.h.b16 %v329
      %v439 = vunpack.c.l.b16 %v330
      %v440 = vunpack.c.h.b16 %v330
      %v441 = vunpack.c.l.b16 %v331
      %v442 = vunpack.c.h.b16 %v331
      %v443 = vunpack.c.l.b16 %v332
      %v444 = vunpack.c.h.b16 %v332
      %v445 = vunpack.c.l.b16 %v333
      %v446 = vunpack.c.h.b16 %v333
      %v447 = vunpack.c.l.b16 %v334
      %v448 = vunpack.c.h.b16 %v334
      %v449 = vunpack.c.l.b16 %v335
      %v450 = vunpack.c.h.b16 %v335
      %v451 = vunpack.c.l.b16 %v336
      %v452 = vunpack.c.h.b16 %v336
      %v453 = vunpack.c.l.b16 %v337
      %v454 = vunpack.c.h.b16 %v337
      %v455 = vpack.c.b16 %v387, %v383
      %v456 = vpack.c.b16 %v388, %v384
      %v457 = vpack.c.b16 %v389, %v385
      %v458 = vpack.c.b16 %v390, %v386
      %v459 = vpack.c.b16 %v395, %v391
      %v460 = vpack.c.b16 %v396, %v392
      %v461 = vpack.c.b16 %v397, %v393
      %v462 = vpack.c.b16 %v398, %v394
      %v463 = vpack.c.b16 %v403, %v399
      %v464 = vpack.c.b16 %v404, %v400
      %v465 = vpack.c.b16 %v405, %v401
      %v466 = vpack.c.b16 %v406, %v402
      %v467 = vpack.c.b16 %v411, %v407
      %v468 = vpack.c.b16 %v412, %v408
      %v469 = vpack.c.b16 %v413, %v409
      %v470 = vpack.c.b16 %v414, %v410
      %v471 = vpack.c.b16 %v419, %v415
      %v472 = vpack.c.b16 %v420, %v416
      %v473 = vpack.c.b16 %v421, %v417
      %v474 = vpack.c.b16 %v422, %v418
      %v475 = vpack.c.b16 %v427, %v423
      %v476 = vpack.c.b16 %v428, %v424
      %v477 = vpack.c.b16 %v429, %v425
      %v478 = vpack.c.b16 %v430, %v426
      %v479 = vpack.c.b16 %v435, %v431
      %v480 = vpack.c.b16 %v436, %v432
      %v481 = vpack.c.b16 %v437, %v433
      %v482 = vpack.c.b16 %v438, %v434
      %v483 = vpack.c.b16 %v443, %v439
      %v484 = vpack.c.b16 %v444, %v440
      %v485 = vpack.c.b16 %v445, %v441
      %v486 = vpack.c.b16 %v446, %v442
      %v487 = vpack.c.b16 %v451, %v447
      %v488 = vpack.c.b16 %v452, %v448
      %v489 = vpack.c.b16 %v453, %v449
      %v490 = vpack.c.b16 %v454, %v450
      %vm527 = vcmask 130048
      %v529 = vsel %vm527, %v345, 0
      %531 = vmatprep.subr.bf16.mxu0 %v456
      %532 = vmatpush1.bf16.msra.mxu0 %v455
      %533 = vmatprep.subr.bf16.mxu0 %v460
      %534 = vmatpush1.bf16.msra.mxu0 %v459
      %535 = vmatprep.subr.bf16.mxu0 %v464
      %536 = vmatpush1.bf16.msra.mxu0 %v463
      %537 = vmatprep.subr.bf16.mxu0 %v468
      %538 = vmatpush1.bf16.msra.mxu0 %v467
      %539 = vmatprep.subr.bf16.mxu0 %v472
      %540 = vmatpush1.bf16.msra.mxu0 %v471
      %541 = vmatprep.subr.bf16.mxu0 %v476
      %542 = vmatpush1.bf16.msra.mxu0 %v475
      %543 = vmatprep.subr.bf16.mxu0 %v480
      %544 = vmatpush1.bf16.msra.mxu0 %v479
      %545 = vmatprep.subr.bf16.mxu0 %v484
      %546 = vmatpush1.bf16.msra.mxu0 %v483
      %547 = vmatprep.subr.bf16.mxu0 %v488
      %548 = vmatpush1.bf16.msra.mxu0 %v487
      %549 = vmatprep.subr.bf16.mxu0 0
      %550 = vmatpush1.bf16.msra.mxu0 0
      %551 = vmatprep.subr.bf16.mxu0 0
      %552 = vmatpush1.bf16.msra.mxu0 0
      %553 = vmatprep.subr.bf16.mxu0 0
      %554 = vmatpush1.bf16.msra.mxu0 0
      %555 = vmatprep.subr.bf16.mxu0 0
      %556 = vmatpush1.bf16.msra.mxu0 0
      %557 = vmatprep.subr.bf16.mxu0 0
      %558 = vmatpush1.bf16.msra.mxu0 0
      %559 = vmatprep.subr.bf16.mxu0 0
      %560 = vmatpush1.bf16.msra.mxu0 0
      %561 = vmatprep.subr.bf16.mxu0 0
      %562 = vmatpush1.bf16.msra.mxu0 0
      %563 = vmatprep.mubr.bf16.mxu0 %v529
      %564 = vmatmul.mubr.bf16.gmra.mrb[0].mxu0 %v344
      %v565 = vpop.f32.mrb[0].mxu0
      %v566 = vadd.f32 0.0, %v565
      %v567 = vpop.f32.mrb[0].mxu0
      %v568 = vadd.f32 0.0, %v567
      %v569 = vpop.f32.mrb[0].mxu0
      %v570 = vadd.f32 0.0, %v569
      %v571 = vpop.f32.mrb[0].mxu0
      %v572 = vadd.f32 0.0, %v571
      %573 = vdwg.mxu0
      %574 = vmatprep.subr.bf16.mxu0 %v458
      %575 = vmatpush1.bf16.msra.mxu0 %v457
      %576 = vmatprep.subr.bf16.mxu0 %v462
      %577 = vmatpush1.bf16.msra.mxu0 %v461
      %578 = vmatprep.subr.bf16.mxu0 %v466
      %579 = vmatpush1.bf16.msra.mxu0 %v465
      %580 = vmatprep.subr.bf16.mxu0 %v470
      %581 = vmatpush1.bf16.msra.mxu0 %v469
      %582 = vmatprep.subr.bf16.mxu0 %v474
      %583 = vmatpush1.bf16.msra.mxu0 %v473
      %584 = vmatprep.subr.bf16.mxu0 %v478
      %585 = vmatpush1.bf16.msra.mxu0 %v477
      %586 = vmatprep.subr.bf16.mxu0 %v482
      %587 = vmatpush1.bf16.msra.mxu0 %v481
      %588 = vmatprep.subr.bf16.mxu0 %v486
      %589 = vmatpush1.bf16.msra.mxu0 %v485
      %590 = vmatprep.subr.bf16.mxu0 %v490
      %591 = vmatpush1.bf16.msra.mxu0 %v489
      %592 = vmatprep.subr.bf16.mxu0 0
      %593 = vmatpush1.bf16.msra.mxu0 0
      %594 = vmatprep.subr.bf16.mxu0 0
      %595 = vmatpush1.bf16.msra.mxu0 0
      %596 = vmatprep.subr.bf16.mxu0 0
      %597 = vmatpush1.bf16.msra.mxu0 0
      %598 = vmatprep.subr.bf16.mxu0 0
      %599 = vmatpush1.bf16.msra.mxu0 0
      %600 = vmatprep.subr.bf16.mxu0 0
      %601 = vmatpush1.bf16.msra.mxu0 0
      %602 = vmatprep.subr.bf16.mxu0 0
      %603 = vmatpush1.bf16.msra.mxu0 0
      %604 = vmatprep.subr.bf16.mxu0 0
      %605 = vmatpush1.bf16.msra.mxu0 0
      %606 = vmatprep.mubr.bf16.mxu0 %v529
      %607 = vmatmul.mubr.bf16.gmra.mrb[0].mxu0 %v344
      %v608 = vpop.f32.mrb[0].mxu0
      %v609 = vadd.f32 0.0, %v608
      %v610 = vpop.f32.mrb[0].mxu0
      %v611 = vadd.f32 0.0, %v610
      %v612 = vpop.f32.mrb[0].mxu0
      %v613 = vadd.f32 0.0, %v612
      %v614 = vpop.f32.mrb[0].mxu0
      %v615 = vadd.f32 0.0, %v614
      %616 = vdwg.mxu0
      %v617 = vmax.f32 %v566, 0.0
      %v618 = vmax.f32 %v568, 0.0
      %v619 = vmax.f32 %v609, 0.0
      %v620 = vmax.f32 %v611, 0.0
      %v621 = vmax.f32 %v570, 0.0
      %v622 = vmax.f32 %v572, 0.0
      %v623 = vmax.f32 %v613, 0.0
      %v624 = vmax.f32 %v615, 0.0
      %v625 = vadd.f32 %v617, %v618
      %626 = vadd.xlane.f32.xlu0 %v625
      %v627 = vpop.xlane.xlu0 %626
      %v628 = vadd.f32 %v621, %v622
      %629 = vadd.xlane.f32.xlu0 %v628
      %v630 = vpop.xlane.xlu0 %629
      %v631 = vmul.f32 %v627, 0.00390625
      %v632 = vmul.f32 %v630, 0.00390625
      %v633 = vld [vmem:[%s3] sm:$0xff]
      %v634 = vld [vmem:[%s3 + $0x8] sm:$0xff]
      %v635 = vmul.f32 %v633, %v631
      %v636 = vmul.f32 %v634, %v632
      %vm637 = vcmask 15360
      %v638 = vsel %vm637, %v635, 0.0
      %v639 = vsel %vm637, %v636, 0.0
      %v640 = vadd.f32 %v638, %v639
      %v641 = vrot.slane %v640, 4
      %v642 = vadd.f32 %v640, %v641
      %v643 = vrot.slane %v642, 2
      %v644 = vadd.f32 %v642, %v643
      %v645 = vrot.slane %v644, 1
      %v646 = vadd.f32 %v644, %v645
      %v647 = vld [vmem:[%s4] sm:$0x1]
      %v648 = vadd.f32 %v646, %v647
      %v649 = vmax.f32 %v648, 0.0
      %v650 = vld [vmem:[%s5] sm:$0xff]
      %v651 = vld [vmem:[%s5 + $0x8] sm:$0xff]
      %v652 = vlaneseq
      %v653 = vshrl.u32 %v652, 7
      %v654 = vsub.s32 0, %v653
      %v655 = vrot.slane %v649, %v654
      %v656 = vmul.f32 %v650, %v655
      %v657 = vmul.f32 %v651, %v655
      %v658 = vsel %vm637, %v656, 0.0
      %659 = vadd.xlane.f32.xlu0 %v658
      %v660 = vpop.xlane.xlu0 %659
      %v661 = vsel %vm637, %v657, 0.0
      %662 = vadd.xlane.f32.xlu0 %v661
      %v663 = vpop.xlane.xlu0 %662
      %v664 = vld [vmem:[%s6] sm:$0xff]
      %v665 = vld [vmem:[%s6 + $0x8] sm:$0xff]
      %v666 = vadd.f32 %v660, %v664
      %v667 = vadd.f32 %v663, %v665
      %v668 = vxor.u32 %v666, 2147483648
      %v669 = vxor.u32 %v667, 2147483648
      %v670 = vmul.f32 %v668, 1.442695
      %v671 = vpow.pop %v670
      %v672 = vmul.f32 %v669, 1.442695
      %v673 = vpow.pop %v672
      %v674 = vadd.f32 %v671, 1.0
      %v675 = vadd.f32 %v673, 1.0
      %v676 = vrcp.pop %v674
      %v677 = vmul.f32 1.0, %v676
      %v678 = vrcp.pop %v675
      %v679 = vmul.f32 1.0, %v678
      %v680 = vld [vmem:[%s293] sm:$0xff]
      %v681 = vld [vmem:[%s293 + $0x8] sm:$0xff]
      %v682 = vld [vmem:[%s293 + $0x20] sm:$0xff]
      %v683 = vld [vmem:[%s293 + $0x28] sm:$0xff]
      %685 = vset.pattern.permute.xlu0 0
      %686 = vperm.xlu0 %685, %v677
      %v687 = vpop.permute.xlu0 %686
      %690 = vset.pattern.permute.xlu0 0
      %691 = vperm.xlu0 %690, %v679
      %v692 = vpop.permute.xlu0 %691
      %v694 = vmul.f32 %v617, %v687
      %v695 = vmul.f32 %v618, %v687
      %v696 = vmul.f32 %v621, %v692
      %v697 = vmul.f32 %v622, %v692
      %v698 = vadd.f32 %v680, %v694
      %v699 = vadd.f32 %v681, %v695
      %v700 = vadd.f32 %v682, %v696
      %v701 = vadd.f32 %v683, %v697
      %702 = vst [vmem:[%s298] sm:$0xff] %v698
      %703 = vst [vmem:[%s298 + $0x8] sm:$0xff] %v699
      %704 = vst [vmem:[%s298 + $0x20] sm:$0xff] %v700
      %705 = vst [vmem:[%s298 + $0x28] sm:$0xff] %v701
      %v706 = vadd.f32 %v619, %v620
      %707 = vadd.xlane.f32.xlu0 %v706
      %v708 = vpop.xlane.xlu0 %707
      %v709 = vadd.f32 %v623, %v624
      %710 = vadd.xlane.f32.xlu0 %v709
      %v711 = vpop.xlane.xlu0 %710
      %v712 = vmul.f32 %v708, 0.00390625
      %v713 = vmul.f32 %v711, 0.00390625
      %v714 = vld [vmem:[%s3] sm:$0xff]
      %v715 = vld [vmem:[%s3 + $0x8] sm:$0xff]
      %v716 = vmul.f32 %v714, %v712
      %v717 = vmul.f32 %v715, %v713
      %v718 = vsel %vm637, %v716, 0.0
      %v719 = vsel %vm637, %v717, 0.0
      %v720 = vadd.f32 %v718, %v719
      %v721 = vrot.slane %v720, 4
      %v722 = vadd.f32 %v720, %v721
      %v723 = vrot.slane %v722, 2
      %v724 = vadd.f32 %v722, %v723
      %v725 = vrot.slane %v724, 1
      %v726 = vadd.f32 %v724, %v725
      %v727 = vld [vmem:[%s4] sm:$0x1]
      %v728 = vadd.f32 %v726, %v727
      %v729 = vmax.f32 %v728, 0.0
      %v730 = vld [vmem:[%s5] sm:$0xff]
      %v731 = vld [vmem:[%s5 + $0x8] sm:$0xff]
      %v732 = vlaneseq
      %v733 = vshrl.u32 %v732, 7
      %v734 = vsub.s32 0, %v733
      %v735 = vrot.slane %v729, %v734
      %v736 = vmul.f32 %v730, %v735
      %v737 = vmul.f32 %v731, %v735
      %v738 = vsel %vm637, %v736, 0.0
      %739 = vadd.xlane.f32.xlu0 %v738
      %v740 = vpop.xlane.xlu0 %739
      %v741 = vsel %vm637, %v737, 0.0
      %742 = vadd.xlane.f32.xlu0 %v741
      %v743 = vpop.xlane.xlu0 %742
      %v744 = vld [vmem:[%s6] sm:$0xff]
      %v745 = vld [vmem:[%s6 + $0x8] sm:$0xff]
      %v746 = vadd.f32 %v740, %v744
      %v747 = vadd.f32 %v743, %v745
      %v748 = vxor.u32 %v746, 2147483648
      %v749 = vxor.u32 %v747, 2147483648
      %v750 = vmul.f32 %v748, 1.442695
      %v751 = vpow.pop %v750
      %v752 = vmul.f32 %v749, 1.442695
      %v753 = vpow.pop %v752
      %v754 = vadd.f32 %v751, 1.0
      %v755 = vadd.f32 %v753, 1.0
      %v756 = vrcp.pop %v754
      %v757 = vmul.f32 1.0, %v756
      %v758 = vrcp.pop %v755
      %v759 = vmul.f32 1.0, %v758
      %v760 = vld [vmem:[%s293 + $0x10] sm:$0xff]
      %v761 = vld [vmem:[%s293 + $0x18] sm:$0xff]
      %v762 = vld [vmem:[%s293 + $0x30] sm:$0xff]
      %v763 = vld [vmem:[%s293 + $0x38] sm:$0xff]
      %765 = vset.pattern.permute.xlu0 0
      %766 = vperm.xlu0 %765, %v757
      %v767 = vpop.permute.xlu0 %766
      %770 = vset.pattern.permute.xlu0 0
      %771 = vperm.xlu0 %770, %v759
      %v772 = vpop.permute.xlu0 %771
      %v774 = vmul.f32 %v619, %v767
      %v775 = vmul.f32 %v620, %v767
      %v776 = vmul.f32 %v623, %v772
      %v777 = vmul.f32 %v624, %v772
      %v778 = vadd.f32 %v760, %v774
      %v779 = vadd.f32 %v761, %v775
      %v780 = vadd.f32 %v762, %v776
      %v781 = vadd.f32 %v763, %v777
      %782 = vst [vmem:[%s298 + $0x10] sm:$0xff] %v778
      %783 = vst [vmem:[%s298 + $0x18] sm:$0xff] %v779
      %784 = vst [vmem:[%s298 + $0x30] sm:$0xff] %v780
      %785 = vst [vmem:[%s298 + $0x38] sm:$0xff] %v781
      %p786 = scmp.lt.s32.totalorder %s18, 1
      %s787 = scalar_select %p786, %s18, 1
      %s788 = smul.addr %s787, 8
      %s789 = smul.addr %s788, 8
      %s790 = scalar_lea.vmem %s7, %s789
      // Predicated region
      $region49: #{ca_layer.1} parent=47 // pred_check
        %p791 = pneg %p193
      $region50: #{ca_layer.1} parent=47 // pred_check_branch
        %793 = sbr.rel (%p791) target = $region52
      $region51: #{ca_layer.1} parent=47 // pred_region
        _
      $region52: #{ca_layer.1} parent=47 // pred_fallthru
        _
    $region48: #{ca_layer.1} parent=5 // pred_fallthru
      _
    %p794 = scmp.le.s32.totalorder 2, %s13
    // Predicated region
    $region53: #{ca_layer.1} parent=5 // pred_check
      %p795 = pneg %p794
    $region54: #{ca_layer.1} parent=5 // pred_check_branch
      %797 = sbr.rel (%p795) target = $region56
    $region55: #{ca_layer.1} parent=5 // pred_region
      %s798 = ssub.s32 %s13, 2
      // Predicated region
      $region57: #{ca_layer.1} parent=55 // pred_check
        %p799 = pneg %p199
      $region58: #{ca_layer.1} parent=55 // pred_check_branch
        %801 = sbr.rel (%p799) target = $region60
      $region59: #{ca_layer.1} parent=55 // pred_region
        %p802 = scmp.lt.s32.totalorder %s19, 1
        %s803 = scalar_select %p802, %s19, 1
        %s804 = smul.addr %s803, 8
        %s805 = smul.addr %s804, 8
        %s806 = scalar_lea.vmem %s7, %s805
      $region60: #{ca_layer.1} parent=55 // pred_fallthru
        _
    $region56: #{ca_layer.1} parent=5 // pred_fallthru
      _
  $region6: #{ca_layer.1} parent=0 // loop_footer
    %s17 = sadd.s32 1, %s13
  $region7: #{ca_layer.1} parent=0 // loop_footer_branch
    %12 = sbr.rel target = $region3
  $region8: #{ca_layer.1} parent=0 // loop_exit
    _

</llo_original>
